<compile_context>
chip_gen: v7x
topology: tpu7x:2x2x1
jax: 0.10.0
libtpu: 0.0.40
codegen_flags: <defaults>
</compile_context>

<pallas_src>
import functools

import jax
import jax.numpy as jnp
from jax.experimental import pallas as pl
from jax.experimental.pallas import tpu as pltpu


def _gram_kernel(x_ref, g_ref, *, tk, d, mask_last):
    """One feature chunk: partial Gram  G_k = X[:, chunk] @ X[:, chunk]^T."""
    x = x_ref[...]                                    # (B, tk), input dtype
    if mask_last:
        # D is not a multiple of tk: zero out the out-of-range columns of the
        # (ragged) final block so the padded lanes don't pollute the Gram sum.
        k = pl.program_id(0)
        col = jax.lax.broadcasted_iota(jnp.int32, x_ref.shape, 1)
        x = jnp.where(k * tk + col < d, x, jnp.zeros_like(x))
    # Contraction over the long feature axis (MXU, f32 accumulation).
    g = jax.lax.dot_general(
        x, x, (((1,), (1,)), ((), ())),
        preferred_element_type=jnp.float32,
    )                                                  # (B, B)
    g_ref[0] = g


def _gram(x, *, max_block_bytes=8 * 1024 * 1024):
    """Per-chunk partial Gram matrices of x (B, D): returns summed (B, B) f32."""
    b, d = x.shape
    bytes_per_col = max(int(b) * x.dtype.itemsize, 1)

    # Largest feature chunk that keeps the double-buffered input block well
    # under the 32 MiB scoped-VMEM cap (safe on v5e/v6e/v7x alike).
    tk = max_block_bytes // bytes_per_col
    if d <= tk:
        tk = d                                # single block covers the full dim
    else:
        tk = max(128, (tk // 128) * 128)      # lane-aligned tile

    num_chunks = -(-d // tk)
    mask_last = (d % tk) != 0

    kernel = functools.partial(_gram_kernel, tk=tk, d=d, mask_last=mask_last)

    partials = pl.pallas_call(
        kernel,
        out_shape=jax.ShapeDtypeStruct((num_chunks, b, b), jnp.float32),
        grid_spec=pltpu.PrefetchScalarGridSpec(
            num_scalar_prefetch=0,
            grid=(num_chunks,),
            in_specs=[pl.BlockSpec((b, tk), lambda k: (0, k))],
            out_specs=pl.BlockSpec((1, b, b), lambda k: (k, 0, 0)),
        ),
        compiler_params=pltpu.CompilerParams(
            dimension_semantics=("parallel",),      # independent chunks -> 2 TCs on v7x
            vmem_limit_bytes=32 * 1024 * 1024,
        ),
    )(x)

    return jnp.sum(partials, axis=0)                  # (B, B), tiny


def loss_orth(input1, input2):
    """Pallas implementation of LossOrth.forward(input1, input2)."""
    bsz = input1.shape[0]
    x1 = input1.reshape(bsz, -1)                      # keep input dtype (bf16 ok)
    x2 = input2.reshape(bsz, -1)
    d1 = x1.shape[1]
    d2 = x2.shape[1]

    g1 = _gram(x1)                                    # (B, B) f32
    g2 = _gram(x2)                                    # (B, B) f32

    # Row L2 norms come free as sqrt(diag(G)); everything below is O(B^2) glue.
    n1 = jnp.sqrt(jnp.diagonal(g1))
    n2 = jnp.sqrt(jnp.diagonal(g2))
    s1 = 1.0 / (n1 + 1e-6)
    s2 = 1.0 / (n2 + 1e-6)
    g1n = g1 * (s1[:, None] * s1[None, :])            # = A1 @ A1^T
    g2n = g2 * (s2[:, None] * s2[None, :])            # = A2 @ A2^T

    # trace(G1n @ G2n) == ||A1^T A2||_F^2 ; divide by D1*D2 for the mean.
    return jnp.sum(g1n * g2n) / jnp.float32(d1 * d2)


def _loss_orth_ref(input1, input2):
    bsz = input1.shape[0]
    a1 = input1.reshape(bsz, -1).astype(jnp.float32)
    a2 = input2.reshape(bsz, -1).astype(jnp.float32)
    n1 = jnp.linalg.norm(a1, axis=1, keepdims=True)
    n2 = jnp.linalg.norm(a2, axis=1, keepdims=True)
    a1 = a1 / (n1 + 1e-6)
    a2 = a2 / (n2 + 1e-6)
    m = a1.T @ a2
    return jnp.mean(m ** 2)


if __name__ == "__main__":
    key = jax.random.PRNGKey(0)
    k1, k2 = jax.random.split(key)
    # NCHW-shaped inputs (as the torch module would receive from conv stacks).
    input1 = jax.random.normal(k1, (2, 4, 16, 16), dtype=jnp.float32)  # D1 = 1024
    input2 = jax.random.normal(k2, (2, 8, 8, 8), dtype=jnp.float32)    # D2 = 512

    loss_fn = jax.jit(loss_orth)
    loss = jax.block_until_ready(loss_fn(input1, input2))
    ref = jax.block_until_ready(_loss_orth_ref(input1, input2))

    assert jnp.allclose(loss, ref, rtol=1e-4, atol=1e-8), (loss, ref)
    print("KERNEL_OK")
</pallas_src>

<mosaic_0001>
module attributes {stable_mosaic.version = 11 : i64} {
  func.func @_gram_kernel(%arg0: i32, %arg1: memref<2x1024xf32, #tpu.memory_space<vmem>>, %arg2: memref<1x2x2xf32, #tpu.memory_space<vmem>>) attributes {dimension_semantics = [#tpu.dimension_semantics<parallel>], iteration_bounds = array<i64: 1>, scalar_prefetch = 0 : i64, scratch_operands = 0 : i64, tpu.core_type = #tpu.core_type<tc>, window_params = [{transform_indices = @transform_0, window_bounds = array<i64: 2, 1024>}, {transform_indices = @transform_1, window_bounds = array<i64: 1, 2, 2>}]} {
    %c0 = arith.constant 0 : index
    %c0_0 = arith.constant 0 : index
    %0 = vector.load %arg1[%c0, %c0_0] : memref<2x1024xf32, #tpu.memory_space<vmem>>, vector<2x1024xf32>
    %cst = arith.constant dense<0.000000e+00> : vector<2x2xf32>
    %1 = tpu.matmul %0, %0, %cst {dimension_numbers = #tpu.dot_dimension_numbers<[1], [1], [0], [0], [0, 0, 1, 0], [], []>} : vector<2x1024xf32>, vector<2x1024xf32>, vector<2x2xf32> -> vector<2x2xf32>
    %c0_1 = arith.constant 0 : index
    %c0_2 = arith.constant 0 : index
    %c0_3 = arith.constant 0 : index
    %2 = vector.load %arg2[%c0_1, %c0_2, %c0_3] : memref<1x2x2xf32, #tpu.memory_space<vmem>>, vector<1x2x2xf32>
    %3 = vector.shape_cast %2 : vector<1x2x2xf32> to vector<2x2xf32>
    %4 = vector.shape_cast %1 : vector<2x2xf32> to vector<1x2x2xf32>
    tpu.vector_store %arg2[%c0_1, %c0_2, %c0_3], %4 {strides = array<i32>} : memref<1x2x2xf32, #tpu.memory_space<vmem>>, vector<1x2x2xf32>,
    return
  }
  func.func @transform_0(%arg0: i32) -> (i32, i32) {
    %c0_i32 = arith.constant 0 : i32
    %c0_i32_0 = arith.constant 0 : i32
    return %c0_i32, %arg0 : i32, i32
  }
  func.func @transform_1(%arg0: i32) -> (i32, i32, i32) {
    %c0_i32 = arith.constant 0 : i32
    %c0_i32_0 = arith.constant 0 : i32
    %c0_i32_1 = arith.constant 0 : i32
    return %arg0, %c0_i32, %c0_i32_0 : i32, i32, i32
  }
}

module attributes {stable_mosaic.version = 11 : i64} {
  func.func @_gram_kernel(%arg0: i32, %arg1: memref<2x512xf32, #tpu.memory_space<vmem>>, %arg2: memref<1x2x2xf32, #tpu.memory_space<vmem>>) attributes {dimension_semantics = [#tpu.dimension_semantics<parallel>], iteration_bounds = array<i64: 1>, scalar_prefetch = 0 : i64, scratch_operands = 0 : i64, tpu.core_type = #tpu.core_type<tc>, window_params = [{transform_indices = @transform_0, window_bounds = array<i64: 2, 512>}, {transform_indices = @transform_1, window_bounds = array<i64: 1, 2, 2>}]} {
    %c0 = arith.constant 0 : index
    %c0_0 = arith.constant 0 : index
    %0 = vector.load %arg1[%c0, %c0_0] : memref<2x512xf32, #tpu.memory_space<vmem>>, vector<2x512xf32>
    %cst = arith.constant dense<0.000000e+00> : vector<2x2xf32>
    %1 = tpu.matmul %0, %0, %cst {dimension_numbers = #tpu.dot_dimension_numbers<[1], [1], [0], [0], [0, 0, 1, 0], [], []>} : vector<2x512xf32>, vector<2x512xf32>, vector<2x2xf32> -> vector<2x2xf32>
    %c0_1 = arith.constant 0 : index
    %c0_2 = arith.constant 0 : index
    %c0_3 = arith.constant 0 : index
    %2 = vector.load %arg2[%c0_1, %c0_2, %c0_3] : memref<1x2x2xf32, #tpu.memory_space<vmem>>, vector<1x2x2xf32>
    %3 = vector.shape_cast %2 : vector<1x2x2xf32> to vector<2x2xf32>
    %4 = vector.shape_cast %1 : vector<2x2xf32> to vector<1x2x2xf32>
    tpu.vector_store %arg2[%c0_1, %c0_2, %c0_3], %4 {strides = array<i32>} : memref<1x2x2xf32, #tpu.memory_space<vmem>>, vector<1x2x2xf32>,
    return
  }
  func.func @transform_0(%arg0: i32) -> (i32, i32) {
    %c0_i32 = arith.constant 0 : i32
    %c0_i32_0 = arith.constant 0 : i32
    return %c0_i32, %arg0 : i32, i32
  }
  func.func @transform_1(%arg0: i32) -> (i32, i32, i32) {
    %c0_i32 = arith.constant 0 : i32
    %c0_i32_0 = arith.constant 0 : i32
    %c0_i32_1 = arith.constant 0 : i32
    return %arg0, %c0_i32, %c0_i32_0 : i32, i32, i32
  }
}

</mosaic_0001>

<llo_original>
// kernel: loss_orth.3
$region0: #{loss_orth.3}
  #allocation0 [shape = 'u32[]', space=smem, size = 0x4, offset = 0x4, fixed_abs, tag = 'smem constant byte address 0x4 - core index']
  #allocation1 [shape = 'u32[144,128]{1,0:T(1,128)}', space=vmem, size = 0x12000, scoped, tag = 'internal scratch']
  %s0 = inlined_call_operand.vmem [shape: f32[2,512], index: 0, kind: input, shape index: {}]
  %s1 = inlined_call_operand.vmem [shape: f32[1,2,2], index: 1, kind: output, shape index: {}]
  %s2 = sld [smem:[#allocation0]]
  $region14: #{loss_orth.3} parent=0
    _
  %s4 = ssub.s32 1, %s2
  %s5 = scalar_select 0, %s4, %s2
  // Predicated region
  $region2: #{loss_orth.3} parent=0 // pred_check
    _
  $region3: #{loss_orth.3} parent=0 // pred_check_branch
    %7 = sbr.rel (0) target = $region5
  $region4: #{loss_orth.3} parent=0 // pred_region
    _
  $region5: #{loss_orth.3} parent=0 // pred_fallthru
    _
  %v8 = vld [vmem:[%s0] sm:$0xff]
  %v10 = vcombine.high %v8, %v8
  %v12 = vunpack.c.l.s4 1983009808
  %v13 = vunpack.c.0.s8 %v12
  %v14 = vlaneseq
  %v15 = vshrl.u32 %v14, 7
  %v16 = vsub.s32 %v13, %v15
  %v17 = vrot.slane %v8, %v16
  %v19 = vunpack.c.l.s4 1983009808
  %v20 = vunpack.c.0.s8 %v19
  %v21 = vlaneseq
  %v22 = vshrl.u32 %v21, 7
  %v23 = vsub.s32 %v20, %v22
  %v24 = vrot.slane %v10, %v23
  %v25 = vcombine.high %v17, %v17
  %v26 = vcombine.high %v24, %v24
  %31 = vmatprep.subr.mxu0 %v25
  %32 = vmatpush1.xpose.msra.mxu0 %v17
  %33 = vmatprep.subr.mxu0 0.0
  %34 = vmatpush1.xpose.msra.mxu0 0.0
  %35 = vmatprep.subr.mxu0 0.0
  %36 = vmatpush1.xpose.msra.mxu0 0.0
  %37 = vmatprep.subr.mxu0 0.0
  %38 = vmatpush1.xpose.msra.mxu0 0.0
  %39 = vmatprep.subr.mxu0 0.0
  %40 = vmatpush1.xpose.msra.mxu0 0.0
  %41 = vmatprep.subr.mxu0 0.0
  %42 = vmatpush1.xpose.msra.mxu0 0.0
  %43 = vmatprep.subr.mxu0 0.0
  %44 = vmatpush1.xpose.msra.mxu0 0.0
  %45 = vmatprep.subr.mxu0 0.0
  %46 = vmatpush1.xpose.msra.mxu0 0.0
  %47 = vmatprep.subr.mxu0 0.0
  %48 = vmatpush1.xpose.msra.mxu0 0.0
  %49 = vmatprep.subr.mxu0 0.0
  %50 = vmatpush1.xpose.msra.mxu0 0.0
  %51 = vmatprep.subr.mxu0 0.0
  %52 = vmatpush1.xpose.msra.mxu0 0.0
  %53 = vmatprep.subr.mxu0 0.0
  %54 = vmatpush1.xpose.msra.mxu0 0.0
  %55 = vmatprep.subr.mxu0 0.0
  %56 = vmatpush1.xpose.msra.mxu0 0.0
  %57 = vmatprep.subr.mxu0 0.0
  %58 = vmatpush1.xpose.msra.mxu0 0.0
  %59 = vmatprep.subr.mxu0 0.0
  %60 = vmatpush1.xpose.msra.mxu0 0.0
  %61 = vmatprep.subr.mxu0 0.0
  %62 = vmatpush1.xpose.msra.mxu0 0.0
  %63 = vmatprep.subr.mxu0 0.0
  %64 = vmatpush1.xpose.msra.mxu0 0.0
  %65 = vmatprep.subr.mxu0 0.0
  %66 = vmatpush1.xpose.msra.mxu0 0.0
  %67 = vmatprep.subr.mxu0 0.0
  %68 = vmatpush1.xpose.msra.mxu0 0.0
  %69 = vmatprep.subr.mxu0 0.0
  %70 = vmatpush1.xpose.msra.mxu0 0.0
  %71 = vmatprep.subr.mxu0 0.0
  %72 = vmatpush1.xpose.msra.mxu0 0.0
  %73 = vmatprep.subr.mxu0 0.0
  %74 = vmatpush1.xpose.msra.mxu0 0.0
  %75 = vmatprep.subr.mxu0 0.0
  %76 = vmatpush1.xpose.msra.mxu0 0.0
  %77 = vmatprep.subr.mxu0 0.0
  %78 = vmatpush1.xpose.msra.mxu0 0.0
  %79 = vmatprep.subr.mxu0 0.0
  %80 = vmatpush1.xpose.msra.mxu0 0.0
  %81 = vmatprep.subr.mxu0 0.0
  %82 = vmatpush1.xpose.msra.mxu0 0.0
  %83 = vmatprep.subr.mxu0 0.0
  %84 = vmatpush1.xpose.msra.mxu0 0.0
  %85 = vmatprep.subr.mxu0 0.0
  %86 = vmatpush1.xpose.msra.mxu0 0.0
  %87 = vmatprep.subr.mxu0 0.0
  %88 = vmatpush1.xpose.msra.mxu0 0.0
  %89 = vmatprep.subr.mxu0 0.0
  %90 = vmatpush1.xpose.msra.mxu0 0.0
  %91 = vmatprep.subr.mxu0 0.0
  %92 = vmatpush1.xpose.msra.mxu0 0.0
  %93 = vmatprep.subr.mxu0 0.0
  %94 = vmatpush1.xpose.msra.mxu0 0.0
  %95 = vmatprep.mubr.f32.mxu0 %v25
  %96 = vmatmul.mubr.f32.gmra.mrb[0].mxu0 %v17
  %v97 = vpop.f32.mrb[0].mxu0
  %v98 = vadd.f32 0.0, %v97
  %v99 = vpop.f32.mrb[0].mxu0
  %100 = vdwg.mxu0
  %101 = vmatprep.subr.mxu0 %v26
  %102 = vmatpush1.xpose.msra.mxu0 %v24
  %103 = vmatprep.subr.mxu0 0.0
  %104 = vmatpush1.xpose.msra.mxu0 0.0
  %105 = vmatprep.subr.mxu0 0.0
  %106 = vmatpush1.xpose.msra.mxu0 0.0
  %107 = vmatprep.subr.mxu0 0.0
  %108 = vmatpush1.xpose.msra.mxu0 0.0
  %109 = vmatprep.subr.mxu0 0.0
  %110 = vmatpush1.xpose.msra.mxu0 0.0
  %111 = vmatprep.subr.mxu0 0.0
  %112 = vmatpush1.xpose.msra.mxu0 0.0
  %113 = vmatprep.subr.mxu0 0.0
  %114 = vmatpush1.xpose.msra.mxu0 0.0
  %115 = vmatprep.subr.mxu0 0.0
  %116 = vmatpush1.xpose.msra.mxu0 0.0
  %117 = vmatprep.subr.mxu0 0.0
  %118 = vmatpush1.xpose.msra.mxu0 0.0
  %119 = vmatprep.subr.mxu0 0.0
  %120 = vmatpush1.xpose.msra.mxu0 0.0
  %121 = vmatprep.subr.mxu0 0.0
  %122 = vmatpush1.xpose.msra.mxu0 0.0
  %123 = vmatprep.subr.mxu0 0.0
  %124 = vmatpush1.xpose.msra.mxu0 0.0
  %125 = vmatprep.subr.mxu0 0.0
  %126 = vmatpush1.xpose.msra.mxu0 0.0
  %127 = vmatprep.subr.mxu0 0.0
  %128 = vmatpush1.xpose.msra.mxu0 0.0
  %129 = vmatprep.subr.mxu0 0.0
  %130 = vmatpush1.xpose.msra.mxu0 0.0
  %131 = vmatprep.subr.mxu0 0.0
  %132 = vmatpush1.xpose.msra.mxu0 0.0
  %133 = vmatprep.subr.mxu0 0.0
  %134 = vmatpush1.xpose.msra.mxu0 0.0
  %135 = vmatprep.subr.mxu0 0.0
  %136 = vmatpush1.xpose.msra.mxu0 0.0
  %137 = vmatprep.subr.mxu0 0.0
  %138 = vmatpush1.xpose.msra.mxu0 0.0
  %139 = vmatprep.subr.mxu0 0.0
  %140 = vmatpush1.xpose.msra.mxu0 0.0
  %141 = vmatprep.subr.mxu0 0.0
  %142 = vmatpush1.xpose.msra.mxu0 0.0
  %143 = vmatprep.subr.mxu0 0.0
  %144 = vmatpush1.xpose.msra.mxu0 0.0
  %145 = vmatprep.subr.mxu0 0.0
  %146 = vmatpush1.xpose.msra.mxu0 0.0
  %147 = vmatprep.subr.mxu0 0.0
  %148 = vmatpush1.xpose.msra.mxu0 0.0
  %149 = vmatprep.subr.mxu0 0.0
  %150 = vmatpush1.xpose.msra.mxu0 0.0
  %151 = vmatprep.subr.mxu0 0.0
  %152 = vmatpush1.xpose.msra.mxu0 0.0
  %153 = vmatprep.subr.mxu0 0.0
  %154 = vmatpush1.xpose.msra.mxu0 0.0
  %155 = vmatprep.subr.mxu0 0.0
  %156 = vmatpush1.xpose.msra.mxu0 0.0
  %157 = vmatprep.subr.mxu0 0.0
  %158 = vmatpush1.xpose.msra.mxu0 0.0
  %159 = vmatprep.subr.mxu0 0.0
  %160 = vmatpush1.xpose.msra.mxu0 0.0
  %161 = vmatprep.subr.mxu0 0.0
  %162 = vmatpush1.xpose.msra.mxu0 0.0
  %163 = vmatprep.subr.mxu0 0.0
  %164 = vmatpush1.xpose.msra.mxu0 0.0
  %165 = vmatprep.mubr.f32.mxu0 %v26
  %166 = vmatmul.mubr.f32.gmra.mrb[0].mxu0 %v24
  %v167 = vpop.f32.mrb[0].mxu0
  %v168 = vadd.f32 %v98, %v167
  %v169 = vpop.f32.mrb[0].mxu0
  %170 = vdwg.mxu0
  %vm171 = vcmask 9216
  %172 = vst.msk [vmem:[%s1] sm:$0x3] %vm171, %v168
  // Predicated region
  $region6: #{loss_orth.3} parent=0 // pred_check
    _
  $region7: #{loss_orth.3} parent=0 // pred_check_branch
    %174 = sbr.rel (0) target = $region9
  $region8: #{loss_orth.3} parent=0 // pred_region
    _
  $region9: #{loss_orth.3} parent=0 // pred_fallthru
    _
  // Predicated region
  $region10: #{loss_orth.3} parent=0 // pred_check
    _
  $region11: #{loss_orth.3} parent=0 // pred_check_branch
    %176 = sbr.rel (0) target = $region13
  $region12: #{loss_orth.3} parent=0 // pred_region
    _
  $region13: #{loss_orth.3} parent=0 // pred_fallthru
    _

// kernel: loss_orth.2
$region0: #{loss_orth.2}
  #allocation0 [shape = 'u32[]', space=smem, size = 0x4, offset = 0x4, fixed_abs, tag = 'smem constant byte address 0x4 - core index']
  #allocation1 [shape = 'u32[144,128]{1,0:T(1,128)}', space=vmem, size = 0x12000, scoped, tag = 'internal scratch']
  %s0 = inlined_call_operand.vmem [shape: f32[2,1024], index: 0, kind: input, shape index: {}]
  %s1 = inlined_call_operand.vmem [shape: f32[1,2,2], index: 1, kind: output, shape index: {}]
  %s2 = sld [smem:[#allocation0]]
  $region14: #{loss_orth.2} parent=0
    _
  %s4 = ssub.s32 1, %s2
  %s5 = scalar_select 0, %s4, %s2
  // Predicated region
  $region2: #{loss_orth.2} parent=0 // pred_check
    _
  $region3: #{loss_orth.2} parent=0 // pred_check_branch
    %7 = sbr.rel (0) target = $region5
  $region4: #{loss_orth.2} parent=0 // pred_region
    _
  $region5: #{loss_orth.2} parent=0 // pred_fallthru
    _
  %v8 = vld [vmem:[%s0] sm:$0xff]
  %v9 = vld [vmem:[%s0 + $0x8] sm:$0xff]
  %v12 = vcombine.high %v8, %v8
  %v14 = vunpack.c.l.s4 1983009808
  %v15 = vunpack.c.0.s8 %v14
  %v16 = vlaneseq
  %v17 = vshrl.u32 %v16, 7
  %v18 = vsub.s32 %v15, %v17
  %v19 = vrot.slane %v8, %v18
  %v21 = vunpack.c.l.s4 1983009808
  %v22 = vunpack.c.0.s8 %v21
  %v23 = vlaneseq
  %v24 = vshrl.u32 %v23, 7
  %v25 = vsub.s32 %v22, %v24
  %v26 = vrot.slane %v12, %v25
  %v27 = vcombine.high %v19, %v19
  %v28 = vcombine.high %v26, %v26
  %v29 = vcombine.high %v9, %v9
  %v31 = vunpack.c.l.s4 1983009808
  %v32 = vunpack.c.0.s8 %v31
  %v33 = vlaneseq
  %v34 = vshrl.u32 %v33, 7
  %v35 = vsub.s32 %v32, %v34
  %v36 = vrot.slane %v9, %v35
  %v38 = vunpack.c.l.s4 1983009808
  %v39 = vunpack.c.0.s8 %v38
  %v40 = vlaneseq
  %v41 = vshrl.u32 %v40, 7
  %v42 = vsub.s32 %v39, %v41
  %v43 = vrot.slane %v29, %v42
  %v44 = vcombine.high %v36, %v36
  %v45 = vcombine.high %v43, %v43
  %54 = vmatprep.subr.mxu0 %v27
  %55 = vmatpush1.xpose.msra.mxu0 %v19
  %56 = vmatprep.subr.mxu0 0.0
  %57 = vmatpush1.xpose.msra.mxu0 0.0
  %58 = vmatprep.subr.mxu0 0.0
  %59 = vmatpush1.xpose.msra.mxu0 0.0
  %60 = vmatprep.subr.mxu0 0.0
  %61 = vmatpush1.xpose.msra.mxu0 0.0
  %62 = vmatprep.subr.mxu0 0.0
  %63 = vmatpush1.xpose.msra.mxu0 0.0
  %64 = vmatprep.subr.mxu0 0.0
  %65 = vmatpush1.xpose.msra.mxu0 0.0
  %66 = vmatprep.subr.mxu0 0.0
  %67 = vmatpush1.xpose.msra.mxu0 0.0
  %68 = vmatprep.subr.mxu0 0.0
  %69 = vmatpush1.xpose.msra.mxu0 0.0
  %70 = vmatprep.subr.mxu0 0.0
  %71 = vmatpush1.xpose.msra.mxu0 0.0
  %72 = vmatprep.subr.mxu0 0.0
  %73 = vmatpush1.xpose.msra.mxu0 0.0
  %74 = vmatprep.subr.mxu0 0.0
  %75 = vmatpush1.xpose.msra.mxu0 0.0
  %76 = vmatprep.subr.mxu0 0.0
  %77 = vmatpush1.xpose.msra.mxu0 0.0
  %78 = vmatprep.subr.mxu0 0.0
  %79 = vmatpush1.xpose.msra.mxu0 0.0
  %80 = vmatprep.subr.mxu0 0.0
  %81 = vmatpush1.xpose.msra.mxu0 0.0
  %82 = vmatprep.subr.mxu0 0.0
  %83 = vmatpush1.xpose.msra.mxu0 0.0
  %84 = vmatprep.subr.mxu0 0.0
  %85 = vmatpush1.xpose.msra.mxu0 0.0
  %86 = vmatprep.subr.mxu0 0.0
  %87 = vmatpush1.xpose.msra.mxu0 0.0
  %88 = vmatprep.subr.mxu0 0.0
  %89 = vmatpush1.xpose.msra.mxu0 0.0
  %90 = vmatprep.subr.mxu0 0.0
  %91 = vmatpush1.xpose.msra.mxu0 0.0
  %92 = vmatprep.subr.mxu0 0.0
  %93 = vmatpush1.xpose.msra.mxu0 0.0
  %94 = vmatprep.subr.mxu0 0.0
  %95 = vmatpush1.xpose.msra.mxu0 0.0
  %96 = vmatprep.subr.mxu0 0.0
  %97 = vmatpush1.xpose.msra.mxu0 0.0
  %98 = vmatprep.subr.mxu0 0.0
  %99 = vmatpush1.xpose.msra.mxu0 0.0
  %100 = vmatprep.subr.mxu0 0.0
  %101 = vmatpush1.xpose.msra.mxu0 0.0
  %102 = vmatprep.subr.mxu0 0.0
  %103 = vmatpush1.xpose.msra.mxu0 0.0
  %104 = vmatprep.subr.mxu0 0.0
  %105 = vmatpush1.xpose.msra.mxu0 0.0
  %106 = vmatprep.subr.mxu0 0.0
  %107 = vmatpush1.xpose.msra.mxu0 0.0
  %108 = vmatprep.subr.mxu0 0.0
  %109 = vmatpush1.xpose.msra.mxu0 0.0
  %110 = vmatprep.subr.mxu0 0.0
  %111 = vmatpush1.xpose.msra.mxu0 0.0
  %112 = vmatprep.subr.mxu0 0.0
  %113 = vmatpush1.xpose.msra.mxu0 0.0
  %114 = vmatprep.subr.mxu0 0.0
  %115 = vmatpush1.xpose.msra.mxu0 0.0
  %116 = vmatprep.subr.mxu0 0.0
  %117 = vmatpush1.xpose.msra.mxu0 0.0
  %118 = vmatprep.mubr.f32.mxu0 %v27
  %119 = vmatmul.mubr.f32.gmra.mrb[0].mxu0 %v19
  %v120 = vpop.f32.mrb[0].mxu0
  %v121 = vadd.f32 0.0, %v120
  %v122 = vpop.f32.mrb[0].mxu0
  %123 = vdwg.mxu0
  %124 = vmatprep.subr.mxu0 %v28
  %125 = vmatpush1.xpose.msra.mxu0 %v26
  %126 = vmatprep.subr.mxu0 0.0
  %127 = vmatpush1.xpose.msra.mxu0 0.0
  %128 = vmatprep.subr.mxu0 0.0
  %129 = vmatpush1.xpose.msra.mxu0 0.0
  %130 = vmatprep.subr.mxu0 0.0
  %131 = vmatpush1.xpose.msra.mxu0 0.0
  %132 = vmatprep.subr.mxu0 0.0
  %133 = vmatpush1.xpose.msra.mxu0 0.0
  %134 = vmatprep.subr.mxu0 0.0
  %135 = vmatpush1.xpose.msra.mxu0 0.0
  %136 = vmatprep.subr.mxu0 0.0
  %137 = vmatpush1.xpose.msra.mxu0 0.0
  %138 = vmatprep.subr.mxu0 0.0
  %139 = vmatpush1.xpose.msra.mxu0 0.0
  %140 = vmatprep.subr.mxu0 0.0
  %141 = vmatpush1.xpose.msra.mxu0 0.0
  %142 = vmatprep.subr.mxu0 0.0
  %143 = vmatpush1.xpose.msra.mxu0 0.0
  %144 = vmatprep.subr.mxu0 0.0
  %145 = vmatpush1.xpose.msra.mxu0 0.0
  %146 = vmatprep.subr.mxu0 0.0
  %147 = vmatpush1.xpose.msra.mxu0 0.0
  %148 = vmatprep.subr.mxu0 0.0
  %149 = vmatpush1.xpose.msra.mxu0 0.0
  %150 = vmatprep.subr.mxu0 0.0
  %151 = vmatpush1.xpose.msra.mxu0 0.0
  %152 = vmatprep.subr.mxu0 0.0
  %153 = vmatpush1.xpose.msra.mxu0 0.0
  %154 = vmatprep.subr.mxu0 0.0
  %155 = vmatpush1.xpose.msra.mxu0 0.0
  %156 = vmatprep.subr.mxu0 0.0
  %157 = vmatpush1.xpose.msra.mxu0 0.0
  %158 = vmatprep.subr.mxu0 0.0
  %159 = vmatpush1.xpose.msra.mxu0 0.0
  %160 = vmatprep.subr.mxu0 0.0
  %161 = vmatpush1.xpose.msra.mxu0 0.0
  %162 = vmatprep.subr.mxu0 0.0
  %163 = vmatpush1.xpose.msra.mxu0 0.0
  %164 = vmatprep.subr.mxu0 0.0
  %165 = vmatpush1.xpose.msra.mxu0 0.0
  %166 = vmatprep.subr.mxu0 0.0
  %167 = vmatpush1.xpose.msra.mxu0 0.0
  %168 = vmatprep.subr.mxu0 0.0
  %169 = vmatpush1.xpose.msra.mxu0 0.0
  %170 = vmatprep.subr.mxu0 0.0
  %171 = vmatpush1.xpose.msra.mxu0 0.0
  %172 = vmatprep.subr.mxu0 0.0
  %173 = vmatpush1.xpose.msra.mxu0 0.0
  %174 = vmatprep.subr.mxu0 0.0
  %175 = vmatpush1.xpose.msra.mxu0 0.0
  %176 = vmatprep.subr.mxu0 0.0
  %177 = vmatpush1.xpose.msra.mxu0 0.0
  %178 = vmatprep.subr.mxu0 0.0
  %179 = vmatpush1.xpose.msra.mxu0 0.0
  %180 = vmatprep.subr.mxu0 0.0
  %181 = vmatpush1.xpose.msra.mxu0 0.0
  %182 = vmatprep.subr.mxu0 0.0
  %183 = vmatpush1.xpose.msra.mxu0 0.0
  %184 = vmatprep.subr.mxu0 0.0
  %185 = vmatpush1.xpose.msra.mxu0 0.0
  %186 = vmatprep.subr.mxu0 0.0
  %187 = vmatpush1.xpose.msra.mxu0 0.0
  %188 = vmatprep.mubr.f32.mxu0 %v28
  %189 = vmatmul.mubr.f32.gmra.mrb[0].mxu0 %v26
  %v190 = vpop.f32.mrb[0].mxu0
  %v191 = vadd.f32 %v121, %v190
  %v192 = vpop.f32.mrb[0].mxu0
  %193 = vdwg.mxu0
  %194 = vmatprep.subr.mxu0 %v44
  %195 = vmatpush1.xpose.msra.mxu0 %v36
  %196 = vmatprep.subr.mxu0 0.0
  %197 = vmatpush1.xpose.msra.mxu0 0.0
  %198 = vmatprep.subr.mxu0 0.0
  %199 = vmatpush1.xpose.msra.mxu0 0.0
  %200 = vmatprep.subr.mxu0 0.0
  %201 = vmatpush1.xpose.msra.mxu0 0.0
  %202 = vmatprep.subr.mxu0 0.0
  %203 = vmatpush1.xpose.msra.mxu0 0.0
  %204 = vmatprep.subr.mxu0 0.0
  %205 = vmatpush1.xpose.msra.mxu0 0.0
  %206 = vmatprep.subr.mxu0 0.0
  %207 = vmatpush1.xpose.msra.mxu0 0.0
  %208 = vmatprep.subr.mxu0 0.0
  %209 = vmatpush1.xpose.msra.mxu0 0.0
  %210 = vmatprep.subr.mxu0 0.0
  %211 = vmatpush1.xpose.msra.mxu0 0.0
  %212 = vmatprep.subr.mxu0 0.0
  %213 = vmatpush1.xpose.msra.mxu0 0.0
  %214 = vmatprep.subr.mxu0 0.0
  %215 = vmatpush1.xpose.msra.mxu0 0.0
  %216 = vmatprep.subr.mxu0 0.0
  %217 = vmatpush1.xpose.msra.mxu0 0.0
  %218 = vmatprep.subr.mxu0 0.0
  %219 = vmatpush1.xpose.msra.mxu0 0.0
  %220 = vmatprep.subr.mxu0 0.0
  %221 = vmatpush1.xpose.msra.mxu0 0.0
  %222 = vmatprep.subr.mxu0 0.0
  %223 = vmatpush1.xpose.msra.mxu0 0.0
  %224 = vmatprep.subr.mxu0 0.0
  %225 = vmatpush1.xpose.msra.mxu0 0.0
  %226 = vmatprep.subr.mxu0 0.0
  %227 = vmatpush1.xpose.msra.mxu0 0.0
  %228 = vmatprep.subr.mxu0 0.0
  %229 = vmatpush1.xpose.msra.mxu0 0.0
  %230 = vmatprep.subr.mxu0 0.0
  %231 = vmatpush1.xpose.msra.mxu0 0.0
  %232 = vmatprep.subr.mxu0 0.0
  %233 = vmatpush1.xpose.msra.mxu0 0.0
  %234 = vmatprep.subr.mxu0 0.0
  %235 = vmatpush1.xpose.msra.mxu0 0.0
  %236 = vmatprep.subr.mxu0 0.0
  %237 = vmatpush1.xpose.msra.mxu0 0.0
  %238 = vmatprep.subr.mxu0 0.0
  %239 = vmatpush1.xpose.msra.mxu0 0.0
  %240 = vmatprep.subr.mxu0 0.0
  %241 = vmatpush1.xpose.msra.mxu0 0.0
  %242 = vmatprep.subr.mxu0 0.0
  %243 = vmatpush1.xpose.msra.mxu0 0.0
  %244 = vmatprep.subr.mxu0 0.0
  %245 = vmatpush1.xpose.msra.mxu0 0.0
  %246 = vmatprep.subr.mxu0 0.0
  %247 = vmatpush1.xpose.msra.mxu0 0.0
  %248 = vmatprep.subr.mxu0 0.0
  %249 = vmatpush1.xpose.msra.mxu0 0.0
  %250 = vmatprep.subr.mxu0 0.0
  %251 = vmatpush1.xpose.msra.mxu0 0.0
  %252 = vmatprep.subr.mxu0 0.0
  %253 = vmatpush1.xpose.msra.mxu0 0.0
  %254 = vmatprep.subr.mxu0 0.0
  %255 = vmatpush1.xpose.msra.mxu0 0.0
  %256 = vmatprep.subr.mxu0 0.0
  %257 = vmatpush1.xpose.msra.mxu0 0.0
  %258 = vmatprep.mubr.f32.mxu0 %v44
  %259 = vmatmul.mubr.f32.gmra.mrb[0].mxu0 %v36
  %v260 = vpop.f32.mrb[0].mxu0
  %v261 = vadd.f32 %v191, %v260
  %v262 = vpop.f32.mrb[0].mxu0
  %263 = vdwg.mxu0
  %264 = vmatprep.subr.mxu0 %v45
  %265 = vmatpush1.xpose.msra.mxu0 %v43
  %266 = vmatprep.subr.mxu0 0.0
  %267 = vmatpush1.xpose.msra.mxu0 0.0
  %268 = vmatprep.subr.mxu0 0.0
  %269 = vmatpush1.xpose.msra.mxu0 0.0
  %270 = vmatprep.subr.mxu0 0.0
  %271 = vmatpush1.xpose.msra.mxu0 0.0
  %272 = vmatprep.subr.mxu0 0.0
  %273 = vmatpush1.xpose.msra.mxu0 0.0
  %274 = vmatprep.subr.mxu0 0.0
  %275 = vmatpush1.xpose.msra.mxu0 0.0
  %276 = vmatprep.subr.mxu0 0.0
  %277 = vmatpush1.xpose.msra.mxu0 0.0
  %278 = vmatprep.subr.mxu0 0.0
  %279 = vmatpush1.xpose.msra.mxu0 0.0
  %280 = vmatprep.subr.mxu0 0.0
  %281 = vmatpush1.xpose.msra.mxu0 0.0
  %282 = vmatprep.subr.mxu0 0.0
  %283 = vmatpush1.xpose.msra.mxu0 0.0
  %284 = vmatprep.subr.mxu0 0.0
  %285 = vmatpush1.xpose.msra.mxu0 0.0
  %286 = vmatprep.subr.mxu0 0.0
  %287 = vmatpush1.xpose.msra.mxu0 0.0
  %288 = vmatprep.subr.mxu0 0.0
  %289 = vmatpush1.xpose.msra.mxu0 0.0
  %290 = vmatprep.subr.mxu0 0.0
  %291 = vmatpush1.xpose.msra.mxu0 0.0
  %292 = vmatprep.subr.mxu0 0.0
  %293 = vmatpush1.xpose.msra.mxu0 0.0
  %294 = vmatprep.subr.mxu0 0.0
  %295 = vmatpush1.xpose.msra.mxu0 0.0
  %296 = vmatprep.subr.mxu0 0.0
  %297 = vmatpush1.xpose.msra.mxu0 0.0
  %298 = vmatprep.subr.mxu0 0.0
  %299 = vmatpush1.xpose.msra.mxu0 0.0
  %300 = vmatprep.subr.mxu0 0.0
  %301 = vmatpush1.xpose.msra.mxu0 0.0
  %302 = vmatprep.subr.mxu0 0.0
  %303 = vmatpush1.xpose.msra.mxu0 0.0
  %304 = vmatprep.subr.mxu0 0.0
  %305 = vmatpush1.xpose.msra.mxu0 0.0
  %306 = vmatprep.subr.mxu0 0.0
  %307 = vmatpush1.xpose.msra.mxu0 0.0
  %308 = vmatprep.subr.mxu0 0.0
  %309 = vmatpush1.xpose.msra.mxu0 0.0
  %310 = vmatprep.subr.mxu0 0.0
  %311 = vmatpush1.xpose.msra.mxu0 0.0
  %312 = vmatprep.subr.mxu0 0.0
  %313 = vmatpush1.xpose.msra.mxu0 0.0
  %314 = vmatprep.subr.mxu0 0.0
  %315 = vmatpush1.xpose.msra.mxu0 0.0
  %316 = vmatprep.subr.mxu0 0.0
  %317 = vmatpush1.xpose.msra.mxu0 0.0
  %318 = vmatprep.subr.mxu0 0.0
  %319 = vmatpush1.xpose.msra.mxu0 0.0
  %320 = vmatprep.subr.mxu0 0.0
  %321 = vmatpush1.xpose.msra.mxu0 0.0
  %322 = vmatprep.subr.mxu0 0.0
  %323 = vmatpush1.xpose.msra.mxu0 0.0
  %324 = vmatprep.subr.mxu0 0.0
  %325 = vmatpush1.xpose.msra.mxu0 0.0
  %326 = vmatprep.subr.mxu0 0.0
  %327 = vmatpush1.xpose.msra.mxu0 0.0
  %328 = vmatprep.mubr.f32.mxu0 %v45
  %329 = vmatmul.mubr.f32.gmra.mrb[0].mxu0 %v43
  %v330 = vpop.f32.mrb[0].mxu0
  %v331 = vadd.f32 %v261, %v330
  %v332 = vpop.f32.mrb[0].mxu0
  %333 = vdwg.mxu0
  %vm334 = vcmask 9216
  %335 = vst.msk [vmem:[%s1] sm:$0x3] %vm334, %v331
  // Predicated region
  $region6: #{loss_orth.2} parent=0 // pred_check
    _
  $region7: #{loss_orth.2} parent=0 // pred_check_branch
    %337 = sbr.rel (0) target = $region9
  $region8: #{loss_orth.2} parent=0 // pred_region
    _
  $region9: #{loss_orth.2} parent=0 // pred_fallthru
    _
  // Predicated region
  $region10: #{loss_orth.2} parent=0 // pred_check
    _
  $region11: #{loss_orth.2} parent=0 // pred_check_branch
    %339 = sbr.rel (0) target = $region13
  $region12: #{loss_orth.2} parent=0 // pred_region
    _
  $region13: #{loss_orth.2} parent=0 // pred_fallthru
    _

</llo_original>
